<compile_context>
chip_gen: v7x
topology: tpu7x:2x2x1
jax: 0.10.0
libtpu: 0.0.40
codegen_flags: <defaults>
</compile_context>

<pallas_src>
import functools

import jax
import jax.numpy as jnp
from jax import lax
from jax.experimental import pallas as pl
from jax.experimental.pallas import tpu as pltpu

BETA = 1.0
SMOOTH = 1e-5

_LANES = 128
_MAX_BLOCK_ROWS = 32                      # 3 f32 accumulators -> 12 vregs live
_MAX_BLOCK_COLS = 128 * 1024              # bounds dyn-slice count (fold is fori)
_TARGET_BLOCK_BYTES = 4 * 1024 * 1024     # per-input block target (~4 MiB)
_VMEM_LIMIT_BYTES = 32 * 1024 * 1024      # fits v5e/v6e/v7x; >> actual need


def _round_up(x, m):
    return (x + m - 1) // m * m


def _round_down(x, m):
    return max(m, x // m * m)


def _choose_block(bc, hw, itemsize):
    """Pick a lane-dense (block_rows, block_cols) tile of the (B*C, H*W) view.

    Rows are chosen first (kept small so the accumulators stay in vregs), then
    the lane axis is sized from the chosen row count to hit the byte target.
    """
    block_rows = bc if bc <= _MAX_BLOCK_ROWS else _MAX_BLOCK_ROWS
    hw_pad = _round_up(hw, _LANES)
    want_cols = max(_LANES, _TARGET_BLOCK_BYTES // (block_rows * itemsize))
    block_cols = min(hw_pad, _round_down(want_cols, _LANES), _MAX_BLOCK_COLS)
    return block_rows, block_cols


def _dice_partial_kernel(pr_ref, gt_ref, tp_ref, spr_ref, sgt_ref, *,
                         hw, block_cols, n_folds, cps, full_col_blocks,
                         emit_mask, unroll):
    """Accumulates per-(b,c)-row partial sums of gt*pr, pr, gt into lane-dense
    (block_rows, 128) output accumulators across the H*W (last) grid axis."""
    p = pl.program_id(0)            # column-split index (v7x TC sharding)
    j = pl.program_id(2)            # column block within this split
    g = p * cps + j                 # global (unclamped) column-block index

    @pl.when(j == 0)
    def _():
        tp_ref[...] = jnp.zeros_like(tp_ref)
        spr_ref[...] = jnp.zeros_like(spr_ref)
        sgt_ref[...] = jnp.zeros_like(sgt_ref)

    def accumulate(masked):
        col0 = g * block_cols       # global column of lane 0 of this block

        def body(t, carry):
            tp_acc, pr_acc, gt_acc = carry
            lo = pl.multiple_of(t * _LANES, _LANES)
            # Fused per-slice cast / mask / multiply: no full-block temporaries.
            pr_s = pr_ref[:, pl.ds(lo, _LANES)].astype(jnp.float32)
            gt_s = gt_ref[:, pl.ds(lo, _LANES)].astype(jnp.float32)
            if masked:
                lane = lax.broadcasted_iota(jnp.int32, pr_s.shape, 1)
                valid = (col0 + lo + lane) < hw
                pr_s = jnp.where(valid, pr_s, 0.0)
                gt_s = jnp.where(valid, gt_s, 0.0)
            return (tp_acc + gt_s * pr_s, pr_acc + pr_s, gt_acc + gt_s)

        init = (tp_ref[...], spr_ref[...], sgt_ref[...])
        tp_acc, pr_acc, gt_acc = lax.fori_loop(0, n_folds, body, init,
                                               unroll=unroll)
        tp_ref[...] = tp_acc
        spr_ref[...] = pr_acc
        sgt_ref[...] = gt_acc

    if emit_mask:
        # Only blocks at/after the hw boundary (or duplicate blocks from an
        # uneven column split, which are fully masked to zero) pay for the
        # iota/compare/select path; everything else runs the unmasked fold.
        @pl.when(g < full_col_blocks)
        def _():
            accumulate(masked=False)

        @pl.when(g >= full_col_blocks)
        def _():
            accumulate(masked=True)
    else:
        accumulate(masked=False)


def dice_loss(pr, gt, *, beta=BETA, smooth=SMOOTH):
    """pr, gt: NCHW float arrays (f32 or bf16). Returns scalar dice loss."""
    B, C, H, W = pr.shape
    assert gt.shape == pr.shape
    bc, hw = B * C, H * W

    # Free reshapes of the contiguous NCHW arrays: no transpose, no copies.
    pr2 = pr.reshape(bc, hw)
    gt2 = gt.reshape(bc, hw)

    itemsize = jnp.dtype(pr.dtype).itemsize
    block_rows, block_cols = _choose_block(bc, hw, itemsize)
    n_row_blocks = pl.cdiv(bc, block_rows)
    n_col_blocks = pl.cdiv(hw, block_cols)

    # If the row ("parallel") axis has only one block, split the column blocks
    # 2-way on a leading parallel axis so both v7x TensorCores get work
    # (measured neutral on single-TC v5e/v6e).
    n_splits = 2 if (n_row_blocks == 1 and n_col_blocks >= 2) else 1
    cps = pl.cdiv(n_col_blocks, n_splits)      # column blocks per split

    full_col_blocks = hw // block_cols         # blocks with no ragged lanes
    emit_mask = (hw % block_cols != 0) or (n_splits * cps != n_col_blocks)
    n_folds = block_cols // _LANES
    unroll = min(8, n_folds)

    kernel = functools.partial(
        _dice_partial_kernel, hw=hw, block_cols=block_cols, n_folds=n_folds,
        cps=cps, full_col_blocks=full_col_blocks, emit_mask=emit_mask,
        unroll=unroll)

    if n_splits * cps == n_col_blocks:
        col_block = lambda p, j: p * cps + j
    else:
        # Uneven split: clamp the DMA'd block in-bounds; the kernel masks the
        # (fully out-of-range) duplicate block's contribution to zero.
        col_block = lambda p, j: jnp.minimum(p * cps + j, n_col_blocks - 1)

    # NOTE: if bc % block_rows != 0 the last row block reads padded garbage
    # rows; they only affect output rows >= bc, which Pallas discards on the
    # partial-block writeback, so the result is unaffected.
    in_spec = pl.BlockSpec((block_rows, block_cols),
                           lambda p, i, j: (i, col_block(p, j)))
    out_struct = jax.ShapeDtypeStruct((n_splits, bc, _LANES), jnp.float32)
    out_spec = pl.BlockSpec((None, block_rows, _LANES),
                            lambda p, i, j: (p, i, 0))

    tp_p, pr_p, gt_p = pl.pallas_call(
        kernel,
        out_shape=(out_struct, out_struct, out_struct),
        grid=(n_splits, n_row_blocks, cps),
        in_specs=[in_spec, in_spec],
        out_specs=(out_spec, out_spec, out_spec),
        compiler_params=pltpu.CompilerParams(
            dimension_semantics=("parallel", "parallel", "arbitrary"),
            vmem_limit_bytes=_VMEM_LIMIT_BYTES),
    )(pr2, gt2)

    # Tiny JAX post-step: fold the (n_splits, B*C, 128) lane-partials into
    # per-channel sums and apply the dice formula (negligible vs. the stream).
    tp = tp_p.sum(axis=(0, 2)).reshape(B, C).sum(axis=0)
    spr = pr_p.sum(axis=(0, 2)).reshape(B, C).sum(axis=0)
    sgt = gt_p.sum(axis=(0, 2)).reshape(B, C).sum(axis=0)
    fp = spr - tp
    fn = sgt - tp
    beta2 = beta * beta
    score = ((1.0 + beta2) * tp + smooth) / (
        (1.0 + beta2) * tp + beta2 * fn + fp + smooth)
    return (1.0 - jnp.mean(score)).astype(jnp.float32)


def dice_loss_ref(pr, gt, *, beta=BETA, smooth=SMOOTH):
    """Pure-JAX reference mirroring the PyTorch module (f32 accumulation)."""
    gt = jnp.transpose(gt, (0, 2, 3, 1)).astype(jnp.float32)
    pr = jnp.transpose(pr, (0, 2, 3, 1)).astype(jnp.float32)
    tp = jnp.sum(gt * pr, axis=(0, 1, 2))
    fp = jnp.sum(pr, axis=(0, 1, 2)) - tp
    fn = jnp.sum(gt, axis=(0, 1, 2)) - tp
    beta2 = beta * beta
    score = ((1.0 + beta2) * tp + smooth) / (
        (1.0 + beta2) * tp + beta2 * fn + fp + smooth)
    return 1.0 - jnp.mean(score)


if __name__ == "__main__":
    key = jax.random.PRNGKey(0)
    k1, k2 = jax.random.split(key)
    B, C, H, W = 2, 4, 16, 16  # NCHW, same convention as the PyTorch module
    pr = jax.nn.sigmoid(jax.random.normal(k1, (B, C, H, W), dtype=jnp.float32))
    gt = (jax.random.uniform(k2, (B, C, H, W)) > 0.5).astype(jnp.float32)

    loss = jax.block_until_ready(dice_loss(pr, gt))
    ref = jax.block_until_ready(dice_loss_ref(pr, gt))

    assert jnp.allclose(loss, ref, rtol=1e-5, atol=1e-6), (loss, ref)
    print("KERNEL_OK")
</pallas_src>

<mosaic_0001>
module attributes {stable_mosaic.version = 11 : i64} {
  func.func @_dice_partial_kernel(%arg0: i32, %arg1: i32, %arg2: i32, %arg3: memref<8x256xf32, #tpu.memory_space<vmem>>, %arg4: memref<8x256xf32, #tpu.memory_space<vmem>>, %arg5: memref<1x8x128xf32, #tpu.memory_space<vmem>>, %arg6: memref<1x8x128xf32, #tpu.memory_space<vmem>>, %arg7: memref<1x8x128xf32, #tpu.memory_space<vmem>>) attributes {dimension_semantics = [#tpu.dimension_semantics<parallel>, #tpu.dimension_semantics<parallel>, #tpu.dimension_semantics<arbitrary>], iteration_bounds = array<i64: 1, 1, 1>, scalar_prefetch = 0 : i64, scratch_operands = 0 : i64, tpu.core_type = #tpu.core_type<tc>, window_params = [{transform_indices = @transform_0, window_bounds = array<i64: 8, 256>}, {transform_indices = @transform_1, window_bounds = array<i64: 8, 256>}, {transform_indices = @transform_2, window_bounds = array<i64: 1, 8, 128>}, {transform_indices = @transform_3, window_bounds = array<i64: 1, 8, 128>}, {transform_indices = @transform_4, window_bounds = array<i64: 1, 8, 128>}]} {
    %c0_i32 = arith.constant 0 : i32
    %0 = arith.cmpi eq, %arg2, %c0_i32 : i32
    %1 = arith.extui %0 : i1 to i32
    %c0_i32_0 = arith.constant 0 : i32
    %2 = arith.cmpi ne, %1, %c0_i32_0 : i32
    scf.if %2 {
      %cst = arith.constant 0.000000e+00 : f32
      %38 = vector.broadcast %cst : f32 to vector<8x128xf32>
      %c0_24 = arith.constant 0 : index
      %c0_25 = arith.constant 0 : index
      %c0_26 = arith.constant 0 : index
      %39 = vector.load %arg5[%c0_24, %c0_25, %c0_26] : memref<1x8x128xf32, #tpu.memory_space<vmem>>, vector<1x8x128xf32>
      %40 = vector.shape_cast %39 : vector<1x8x128xf32> to vector<8x128xf32>
      %41 = vector.shape_cast %38 : vector<8x128xf32> to vector<1x8x128xf32>
      tpu.vector_store %arg5[%c0_24, %c0_25, %c0_26], %41 {strides = array<i32>} : memref<1x8x128xf32, #tpu.memory_space<vmem>>, vector<1x8x128xf32>,
      %cst_27 = arith.constant 0.000000e+00 : f32
      %42 = vector.broadcast %cst_27 : f32 to vector<8x128xf32>
      %c0_28 = arith.constant 0 : index
      %c0_29 = arith.constant 0 : index
      %c0_30 = arith.constant 0 : index
      %43 = vector.load %arg6[%c0_28, %c0_29, %c0_30] : memref<1x8x128xf32, #tpu.memory_space<vmem>>, vector<1x8x128xf32>
      %44 = vector.shape_cast %43 : vector<1x8x128xf32> to vector<8x128xf32>
      %45 = vector.shape_cast %42 : vector<8x128xf32> to vector<1x8x128xf32>
      tpu.vector_store %arg6[%c0_28, %c0_29, %c0_30], %45 {strides = array<i32>} : memref<1x8x128xf32, #tpu.memory_space<vmem>>, vector<1x8x128xf32>,
      %cst_31 = arith.constant 0.000000e+00 : f32
      %46 = vector.broadcast %cst_31 : f32 to vector<8x128xf32>
      %c0_32 = arith.constant 0 : index
      %c0_33 = arith.constant 0 : index
      %c0_34 = arith.constant 0 : index
      %47 = vector.load %arg7[%c0_32, %c0_33, %c0_34] : memref<1x8x128xf32, #tpu.memory_space<vmem>>, vector<1x8x128xf32>
      %48 = vector.shape_cast %47 : vector<1x8x128xf32> to vector<8x128xf32>
      %49 = vector.shape_cast %46 : vector<8x128xf32> to vector<1x8x128xf32>
      tpu.vector_store %arg7[%c0_32, %c0_33, %c0_34], %49 {strides = array<i32>} : memref<1x8x128xf32, #tpu.memory_space<vmem>>, vector<1x8x128xf32>,
    } else {
    }
    %c0 = arith.constant 0 : index
    %c0_1 = arith.constant 0 : index
    %c0_2 = arith.constant 0 : index
    %3 = vector.load %arg5[%c0, %c0_1, %c0_2] : memref<1x8x128xf32, #tpu.memory_space<vmem>>, vector<1x8x128xf32>
    %4 = vector.shape_cast %3 : vector<1x8x128xf32> to vector<8x128xf32>
    %c0_3 = arith.constant 0 : index
    %c0_4 = arith.constant 0 : index
    %c0_5 = arith.constant 0 : index
    %5 = vector.load %arg6[%c0_3, %c0_4, %c0_5] : memref<1x8x128xf32, #tpu.memory_space<vmem>>, vector<1x8x128xf32>
    %6 = vector.shape_cast %5 : vector<1x8x128xf32> to vector<8x128xf32>
    %c0_6 = arith.constant 0 : index
    %c0_7 = arith.constant 0 : index
    %c0_8 = arith.constant 0 : index
    %7 = vector.load %arg7[%c0_6, %c0_7, %c0_8] : memref<1x8x128xf32, #tpu.memory_space<vmem>>, vector<1x8x128xf32>
    %8 = vector.shape_cast %7 : vector<1x8x128xf32> to vector<8x128xf32>
    %c0_i32_9 = arith.constant 0 : i32
    %c128_i32 = arith.constant 128 : i32
    %9 = arith.muli %c0_i32_9, %c128_i32 : i32
    %10 = tpu.assume_multiple %9, 128 : i32
    %c0_10 = arith.constant 0 : index
    %11 = arith.index_cast %10 : i32 to index
    %12 = vector.load %arg3[%c0_10, %11] : memref<8x256xf32, #tpu.memory_space<vmem>>, vector<8x128xf32>
    %c0_11 = arith.constant 0 : index
    %13 = arith.index_cast %10 : i32 to index
    %14 = vector.load %arg4[%c0_11, %13] : memref<8x256xf32, #tpu.memory_space<vmem>>, vector<8x128xf32>
    %15 = arith.mulf %14, %12 : vector<8x128xf32>
    %16 = arith.addf %4, %15 : vector<8x128xf32>
    %17 = arith.addf %6, %12 : vector<8x128xf32>
    %18 = arith.addf %8, %14 : vector<8x128xf32>
    %c1_i32 = arith.constant 1 : i32
    %c128_i32_12 = arith.constant 128 : i32
    %19 = arith.muli %c1_i32, %c128_i32_12 : i32
    %20 = tpu.assume_multiple %19, 128 : i32
    %c0_13 = arith.constant 0 : index
    %21 = arith.index_cast %20 : i32 to index
    %22 = vector.load %arg3[%c0_13, %21] : memref<8x256xf32, #tpu.memory_space<vmem>>, vector<8x128xf32>
    %c0_14 = arith.constant 0 : index
    %23 = arith.index_cast %20 : i32 to index
    %24 = vector.load %arg4[%c0_14, %23] : memref<8x256xf32, #tpu.memory_space<vmem>>, vector<8x128xf32>
    %25 = arith.mulf %24, %22 : vector<8x128xf32>
    %26 = arith.addf %16, %25 : vector<8x128xf32>
    %27 = arith.addf %17, %22 : vector<8x128xf32>
    %28 = arith.addf %18, %24 : vector<8x128xf32>
    %c2_i32 = arith.constant 2 : i32
    %c0_15 = arith.constant 0 : index
    %c0_16 = arith.constant 0 : index
    %c0_17 = arith.constant 0 : index
    %29 = vector.load %arg5[%c0_15, %c0_16, %c0_17] : memref<1x8x128xf32, #tpu.memory_space<vmem>>, vector<1x8x128xf32>
    %30 = vector.shape_cast %29 : vector<1x8x128xf32> to vector<8x128xf32>
    %31 = vector.shape_cast %26 : vector<8x128xf32> to vector<1x8x128xf32>
    tpu.vector_store %arg5[%c0_15, %c0_16, %c0_17], %31 {strides = array<i32>} : memref<1x8x128xf32, #tpu.memory_space<vmem>>, vector<1x8x128xf32>,
    %c0_18 = arith.constant 0 : index
    %c0_19 = arith.constant 0 : index
    %c0_20 = arith.constant 0 : index
    %32 = vector.load %arg6[%c0_18, %c0_19, %c0_20] : memref<1x8x128xf32, #tpu.memory_space<vmem>>, vector<1x8x128xf32>
    %33 = vector.shape_cast %32 : vector<1x8x128xf32> to vector<8x128xf32>
    %34 = vector.shape_cast %27 : vector<8x128xf32> to vector<1x8x128xf32>
    tpu.vector_store %arg6[%c0_18, %c0_19, %c0_20], %34 {strides = array<i32>} : memref<1x8x128xf32, #tpu.memory_space<vmem>>, vector<1x8x128xf32>,
    %c0_21 = arith.constant 0 : index
    %c0_22 = arith.constant 0 : index
    %c0_23 = arith.constant 0 : index
    %35 = vector.load %arg7[%c0_21, %c0_22, %c0_23] : memref<1x8x128xf32, #tpu.memory_space<vmem>>, vector<1x8x128xf32>
    %36 = vector.shape_cast %35 : vector<1x8x128xf32> to vector<8x128xf32>
    %37 = vector.shape_cast %28 : vector<8x128xf32> to vector<1x8x128xf32>
    tpu.vector_store %arg7[%c0_21, %c0_22, %c0_23], %37 {strides = array<i32>} : memref<1x8x128xf32, #tpu.memory_space<vmem>>, vector<1x8x128xf32>,
    return
  }
  func.func @transform_0(%arg0: i32, %arg1: i32, %arg2: i32) -> (i32, i32) {
    %c1_i32 = arith.constant 1 : i32
    %0 = arith.muli %arg0, %c1_i32 : i32
    %1 = arith.addi %0, %arg2 : i32
    %c0_i32 = arith.constant 0 : i32
    return %arg1, %1 : i32, i32
  }
  func.func @transform_1(%arg0: i32, %arg1: i32, %arg2: i32) -> (i32, i32) {
    %c1_i32 = arith.constant 1 : i32
    %0 = arith.muli %arg0, %c1_i32 : i32
    %1 = arith.addi %0, %arg2 : i32
    %c0_i32 = arith.constant 0 : i32
    return %arg1, %1 : i32, i32
  }
  func.func @transform_2(%arg0: i32, %arg1: i32, %arg2: i32) -> (i32, i32, i32) {
    %c0_i32 = arith.constant 0 : i32
    %c0_i32_0 = arith.constant 0 : i32
    return %arg0, %arg1, %c0_i32 : i32, i32, i32
  }
  func.func @transform_3(%arg0: i32, %arg1: i32, %arg2: i32) -> (i32, i32, i32) {
    %c0_i32 = arith.constant 0 : i32
    %c0_i32_0 = arith.constant 0 : i32
    return %arg0, %arg1, %c0_i32 : i32, i32, i32
  }
  func.func @transform_4(%arg0: i32, %arg1: i32, %arg2: i32) -> (i32, i32, i32) {
    %c0_i32 = arith.constant 0 : i32
    %c0_i32_0 = arith.constant 0 : i32
    return %arg0, %arg1, %c0_i32 : i32, i32, i32
  }
}

</mosaic_0001>

<llo_original>
// kernel: tpu_custom_call.1
$region0: #{tpu_custom_call.1}
  #allocation0 [shape = 'u32[]', space=smem, size = 0x4, offset = 0x4, fixed_abs, tag = 'smem constant byte address 0x4 - core index']
  #allocation1 [shape = 'u32[144,128]{1,0:T(1,128)}', space=vmem, size = 0x12000, scoped, tag = 'internal scratch']
  %s0 = inlined_call_operand.hbm [shape: f32[8,256], index: 0, kind: input, shape index: {}]
  %s1 = inlined_call_operand.hbm [shape: f32[8,256], index: 1, kind: input, shape index: {}]
  %s2 = inlined_call_operand.hbm [shape: f32[1,8,128], index: 2, kind: output, shape index: {0}]
  %s3 = inlined_call_operand.hbm [shape: f32[1,8,128], index: 3, kind: output, shape index: {1}]
  %s4 = inlined_call_operand.hbm [shape: f32[1,8,128], index: 4, kind: output, shape index: {2}]
  %5 = xla_tuple %s2, %s3, %s4
  %s6 = sld [smem:[#allocation0]]
  $region46: #{tpu_custom_call.1} parent=0
    _
  %s8 = ssub.s32 1, %s6
  %s9 = scalar_select 0, %s8, %s6
  $region1: #{tpu_custom_call.1} parent=0
    #allocation2 [shape = 'u8[8192]{0}', space=vmem, size = 0x2000, scoped, tag = 'input window, operand 0, single buffered']
    #allocation3 [shape = 's32[1]{0}', space=sflag, size = 0x4, scoped, tag = 'scoped memory for tpu_custom_call.1']
    #allocation4 [shape = 's32[1]{0}', space=sflag, size = 0x4, scoped, tag = 'scoped memory for tpu_custom_call.1']
    #allocation5 [shape = 'u8[8192]{0}', space=vmem, size = 0x2000, scoped, tag = 'input window, operand 1, single buffered']
    #allocation6 [shape = 's32[1]{0}', space=sflag, size = 0x4, scoped, tag = 'scoped memory for tpu_custom_call.1']
    #allocation7 [shape = 'u8[4096]{0}', space=vmem, size = 0x1000, scoped, tag = 'output window, operand 0, single buffered']
    #allocation8 [shape = 'u8[4096]{0}', space=vmem, size = 0x1000, scoped, tag = 'output window, operand 1, single buffered']
    #allocation9 [shape = 's32[1]{0}', space=sflag, size = 0x4, scoped, tag = 'scoped memory for tpu_custom_call.1']
    #allocation10 [shape = 'u8[4096]{0}', space=vmem, size = 0x1000, scoped, tag = 'output window, operand 2, single buffered']
    %10 = vsyncpa [#allocation3], 0
    %11 = vsyncpa [#allocation6], 0
    %12 = vsyncpa [#allocation4], 0
    %13 = vsyncpa [#allocation9], 0
    // Predicated region
    $region2: #{tpu_custom_call.1} parent=1 // pred_check
      _
    $region3: #{tpu_custom_call.1} parent=1 // pred_check_branch
      %15 = sbr.rel (0) target = $region5
    $region4: #{tpu_custom_call.1} parent=1 // pred_region
      %s16 = sadd.s32 0, 0
      %s17 = smul.u32 2, %s16
      %s19 = ssub.s32 256, 256
      %20 = vsyncadd [#allocation3], %s19
      %s21 = smul.addr %s17, 128
      %s22 = scalar_lea.hbm %s0, %s21
      %s24 = sshll.u32 [#allocation2], 4
      %s25 = int_to_ptr.vmem [resolvable:$true] %s24
      %27 = dma.hbm_to_vmem [thread:$0]  %s22, 256, %s25, [#allocation3]
    $region5: #{tpu_custom_call.1} parent=1 // pred_fallthru
      _
    // Predicated region
    $region6: #{tpu_custom_call.1} parent=1 // pred_check
      _
    $region7: #{tpu_custom_call.1} parent=1 // pred_check_branch
      %29 = sbr.rel (0) target = $region9
    $region8: #{tpu_custom_call.1} parent=1 // pred_region
      %s30 = sadd.s32 0, 0
      %s31 = smul.u32 2, %s30
      %s33 = ssub.s32 256, 256
      %34 = vsyncadd [#allocation6], %s33
      %s35 = smul.addr %s31, 128
      %s36 = scalar_lea.hbm %s1, %s35
      %s38 = sshll.u32 [#allocation5], 4
      %s39 = int_to_ptr.vmem [resolvable:$true] %s38
      %41 = dma.hbm_to_vmem [thread:$0]  %s36, 256, %s39, [#allocation6]
    $region9: #{tpu_custom_call.1} parent=1 // pred_fallthru
      _
    // Predicated region
    $region10: #{tpu_custom_call.1} parent=1 // pred_check
      _
    $region11: #{tpu_custom_call.1} parent=1 // pred_check_branch
      %43 = sbr.rel (0) target = $region13
    $region12: #{tpu_custom_call.1} parent=1 // pred_region
      %44 = dma.done [#allocation3], 256
    $region13: #{tpu_custom_call.1} parent=1 // pred_fallthru
      _
    // Predicated region
    $region14: #{tpu_custom_call.1} parent=1 // pred_check
      _
    $region15: #{tpu_custom_call.1} parent=1 // pred_check_branch
      %46 = sbr.rel (0) target = $region17
    $region16: #{tpu_custom_call.1} parent=1 // pred_region
      %47 = dma.done [#allocation6], 256
    $region17: #{tpu_custom_call.1} parent=1 // pred_fallthru
      _
    %s48 = sadd.s32 0, 0
    %s49 = smul.u32 2, %s48
    %s50 = sadd.s32 0, 0
    %s51 = smul.u32 2, %s50
    %p52 = scmp.eq.s32.totalorder 0, 0
    // Predicated region
    $region18: #{tpu_custom_call.1} parent=1 // pred_check
      %p53 = pneg %p52
    $region19: #{tpu_custom_call.1} parent=1 // pred_check_branch
      %55 = sbr.rel (%p53) target = $region21
    $region20: #{tpu_custom_call.1} parent=1 // pred_region
      %56 = vst [vmem:[#allocation7] sm:$0xff] 0.0
      %57 = vst [vmem:[#allocation8] sm:$0xff] 0.0
      %58 = vst [vmem:[#allocation10] sm:$0xff] 0.0
    $region21: #{tpu_custom_call.1} parent=1 // pred_fallthru
      _
    %v59 = vld [vmem:[#allocation7] sm:$0xff]
    %v60 = vld [vmem:[#allocation8] sm:$0xff]
    %v61 = vld [vmem:[#allocation10] sm:$0xff]
    %v62 = vld [vmem:[#allocation2] sm:$0xff]
    %v63 = vld [vmem:[#allocation5] sm:$0xff]
    %v64 = vmul.f32 %v63, %v62
    %v65 = vadd.f32 %v59, %v64
    %v66 = vadd.f32 %v60, %v62
    %v67 = vadd.f32 %v61, %v63
    %s68 = scalar_lea.vmem [#allocation2], 8
    %v69 = vld [vmem:[%s68] sm:$0xff]
    %s70 = scalar_lea.vmem [#allocation5], 8
    %v71 = vld [vmem:[%s70] sm:$0xff]
    %v72 = vmul.f32 %v71, %v69
    %v73 = vadd.f32 %v65, %v72
    %v74 = vadd.f32 %v66, %v69
    %v75 = vadd.f32 %v67, %v71
    %76 = vst [vmem:[#allocation7] sm:$0xff] %v73
    %77 = vst [vmem:[#allocation8] sm:$0xff] %v74
    %78 = vst [vmem:[#allocation10] sm:$0xff] %v75
    // Predicated region
    $region22: #{tpu_custom_call.1} parent=1 // pred_check
      _
    $region23: #{tpu_custom_call.1} parent=1 // pred_check_branch
      %80 = sbr.rel (0) target = $region25
    $region24: #{tpu_custom_call.1} parent=1 // pred_region
      %s82 = ssub.s32 128, 128
      %83 = vsyncadd [#allocation4], %s82
      %s85 = sshll.u32 [#allocation7], 4
      %s86 = int_to_ptr.vmem [resolvable:$true] %s85
      %88 = dma.vmem_to_hbm [thread:$0]  %s86, 128, %s2, [#allocation4]
    $region25: #{tpu_custom_call.1} parent=1 // pred_fallthru
      _
    // Predicated region
    $region26: #{tpu_custom_call.1} parent=1 // pred_check
      _
    $region27: #{tpu_custom_call.1} parent=1 // pred_check_branch
      %90 = sbr.rel (0) target = $region29
    $region28: #{tpu_custom_call.1} parent=1 // pred_region
      %s92 = ssub.s32 128, 128
      %93 = vsyncadd [#allocation9], %s92
      %s95 = sshll.u32 [#allocation8], 4
      %s96 = int_to_ptr.vmem [resolvable:$true] %s95
      %98 = dma.vmem_to_hbm [thread:$0]  %s96, 128, %s3, [#allocation9]
    $region29: #{tpu_custom_call.1} parent=1 // pred_fallthru
      _
    // Predicated region
    $region30: #{tpu_custom_call.1} parent=1 // pred_check
      _
    $region31: #{tpu_custom_call.1} parent=1 // pred_check_branch
      %100 = sbr.rel (0) target = $region33
    $region32: #{tpu_custom_call.1} parent=1 // pred_region
      %s102 = ssub.s32 128, 128
      %103 = vsyncadd [#allocation9], %s102
      %s105 = sshll.u32 [#allocation10], 4
      %s106 = int_to_ptr.vmem [resolvable:$true] %s105
      %108 = dma.vmem_to_hbm [thread:$0]  %s106, 128, %s4, [#allocation9]
    $region33: #{tpu_custom_call.1} parent=1 // pred_fallthru
      _
    // Predicated region
    $region34: #{tpu_custom_call.1} parent=1 // pred_check
      _
    $region35: #{tpu_custom_call.1} parent=1 // pred_check_branch
      %110 = sbr.rel (0) target = $region37
    $region36: #{tpu_custom_call.1} parent=1 // pred_region
      %111 = dma.done [#allocation4], 128
    $region37: #{tpu_custom_call.1} parent=1 // pred_fallthru
      _
    // Predicated region
    $region38: #{tpu_custom_call.1} parent=1 // pred_check
      _
    $region39: #{tpu_custom_call.1} parent=1 // pred_check_branch
      %113 = sbr.rel (0) target = $region41
    $region40: #{tpu_custom_call.1} parent=1 // pred_region
      %114 = dma.done [#allocation9], 128
    $region41: #{tpu_custom_call.1} parent=1 // pred_fallthru
      _
    // Predicated region
    $region42: #{tpu_custom_call.1} parent=1 // pred_check
      _
    $region43: #{tpu_custom_call.1} parent=1 // pred_check_branch
      %116 = sbr.rel (0) target = $region45
    $region44: #{tpu_custom_call.1} parent=1 // pred_region
      %117 = dma.done [#allocation9], 128
    $region45: #{tpu_custom_call.1} parent=1 // pred_fallthru
      _
    %118 = vsyncpa [#allocation3], 1
    %119 = vsyncpa [#allocation6], 1
    %120 = vsyncpa [#allocation4], 1
    %121 = vsyncpa [#allocation9], 1

</llo_original>
